<compile_context>
chip_gen: v7x
topology: tpu7x:2x2x1
jax: 0.10.0
libtpu: 0.0.40
codegen_flags: <defaults>
</compile_context>

<pallas_src>
import functools

import jax
import jax.numpy as jnp
from jax.experimental import pallas as pl
from jax.experimental.pallas import tpu as pltpu


def _round_up(x, m):
    return ((x + m - 1) // m) * m


# ----------------------------------------------------------------- fused kernel
def _mlp_fused_kernel(x_ref, w_hid_ref, b_hid_ref, w_out_ref, b_out_ref, o_ref):
    """All layers unrolled in one invocation (small-model fast path).

    x_ref:     (B_tile, A_pad)           bf16
    w_hid_ref: (n_hidden, A_pad, A_pad)  bf16   (resident)
    b_hid_ref: (n_hidden, 1, A_pad)      f32
    w_out_ref: (A_pad, O_pad)            bf16
    b_out_ref: (1, O_pad)                f32
    o_ref:     (B_tile, O_pad)           f32
    """
    n_hidden = w_hid_ref.shape[0]
    h = x_ref[...]                                        # bf16 activations
    for l in range(n_hidden):                             # static unroll
        acc = jnp.dot(h, w_hid_ref[l], preferred_element_type=jnp.float32)
        acc = acc + b_hid_ref[l]
        h = jnp.maximum(acc, 0.0).astype(jnp.bfloat16)
    acc = jnp.dot(h, w_out_ref[...], preferred_element_type=jnp.float32)
    o_ref[...] = acc + b_out_ref[...]                     # no ReLU on output layer


# -------------------------------------------------------------- streamed kernel
def _mlp_streamed_kernel(x_ref, w_hid_ref, b_hid_ref, w_out_ref, b_out_ref,
                         o_ref, h_ref):
    """One grid step = one linear layer (layer-streamed path).

    x_ref:     (B_tile, A_pad)    bf16  (resident per batch tile)
    w_hid_ref: (1, A_pad, A_pad)  bf16  (hidden layer l's weights, streamed)
    b_hid_ref: (1, 1, A_pad)      f32
    w_out_ref: (A_pad, O_pad)     bf16  (constant index -> fetched once per core)
    b_out_ref: (1, O_pad)         f32
    o_ref:     (B_tile, O_pad)    f32   (written only at the last layer step)
    h_ref:     (B_tile, A_pad)    bf16  VMEM scratch: running activation
    """
    l = pl.program_id(1)
    n_hidden = pl.num_programs(1) - 1  # last grid step is the output layer

    @pl.when(l == 0)
    def _first_layer():
        acc = jnp.dot(x_ref[...], w_hid_ref[0], preferred_element_type=jnp.float32)
        acc = acc + b_hid_ref[0]
        h_ref[...] = jnp.maximum(acc, 0.0).astype(jnp.bfloat16)

    @pl.when(jnp.logical_and(l > 0, l < n_hidden))
    def _hidden_layer():
        acc = jnp.dot(h_ref[...], w_hid_ref[0], preferred_element_type=jnp.float32)
        acc = acc + b_hid_ref[0]
        h_ref[...] = jnp.maximum(acc, 0.0).astype(jnp.bfloat16)

    @pl.when(l == n_hidden)
    def _output_layer():
        acc = jnp.dot(h_ref[...], w_out_ref[...], preferred_element_type=jnp.float32)
        o_ref[...] = acc + b_out_ref[...]


# ---------------------------------------------------------------- param packing
def pack_params(weights, biases):
    """Pack per-layer params into lane-dense slabs.

    weights[i]: [in_i, out_i] f32 (already transposed vs PyTorch's [out, in]).
    biases[i]:  [out_i] f32.
    Returns (w_hid bf16 [8, A_pad, A_pad], b_hid f32 [8, 1, A_pad],
             w_out bf16 [A_pad, O_pad],    b_out f32 [1, O_pad]).
    """
    n_hidden = len(weights) - 1
    num_i = weights[0].shape[0]
    num_h = weights[0].shape[1]
    out_dim = weights[-1].shape[1]

    A_pad = max(_round_up(num_i, 128), _round_up(num_h, 128))
    O_pad = _round_up(out_dim, 128)

    w_hid = jnp.zeros((n_hidden, A_pad, A_pad), jnp.float32)
    b_hid = jnp.zeros((n_hidden, 1, A_pad), jnp.float32)
    for i in range(n_hidden):
        w = weights[i]
        b = jnp.reshape(biases[i], (1, -1))
        w_hid = w_hid.at[i, : w.shape[0], : w.shape[1]].set(w)
        b_hid = b_hid.at[i, :, : b.shape[1]].set(b)
    w_hid = w_hid.astype(jnp.bfloat16)

    w_o = weights[-1]
    b_o = jnp.reshape(biases[-1], (1, -1))
    w_out = (jnp.zeros((A_pad, O_pad), jnp.float32)
             .at[: w_o.shape[0], : w_o.shape[1]].set(w_o).astype(jnp.bfloat16))
    b_out = jnp.zeros((1, O_pad), jnp.float32).at[:, : b_o.shape[1]].set(b_o)
    return w_hid, b_hid, w_out, b_out


# ----------------------------------------------------------------- VMEM budgets
def _vmem_cap_bytes():
    """Per-generation cap for vmem_limit_bytes, leaving headroom under physical."""
    try:
        physical = int(pltpu.get_tpu_info().vmem_capacity_bytes)
    except Exception:
        physical = 64 << 20  # be conservative (v7x-sized)
    if physical >= (100 << 20):
        return 100 << 20     # v5e / v6e: 128 MiB physical VMEM
    return 48 << 20          # v7x: 64 MiB physical VMEM


def _streamed_vmem_bytes(b_tile, a_pad, o_pad):
    bf16, f32 = 2, 4
    w_stream = 2 * (a_pad * a_pad * bf16 + a_pad * f32)   # double-buffered layer stream
    w_out = 2 * (a_pad * o_pad * bf16 + o_pad * f32)      # constant index, still 2-buffered
    io = 2 * b_tile * a_pad * bf16 + 2 * b_tile * o_pad * f32
    scratch = b_tile * a_pad * bf16
    return w_stream + w_out + io + scratch


def _fused_vmem_bytes(b_tile, n_hidden, a_pad, o_pad):
    bf16, f32 = 2, 4
    params = 2 * (n_hidden * (a_pad * a_pad * bf16 + a_pad * f32)
                  + a_pad * o_pad * bf16 + o_pad * f32)   # all resident, 2-buffered
    io = 2 * b_tile * a_pad * bf16 + 2 * b_tile * o_pad * f32
    live = b_tile * a_pad * (bf16 + f32)                  # unrolled-chain live activations
    return params + io + live


def _choose_b_tile(B, size_fn, budget):
    """Largest sublane-aligned batch tile that fits the VMEM budget."""
    b_pad8 = _round_up(B, 8)
    if b_pad8 <= 512 and size_fn(b_pad8) <= budget:
        b_tile = b_pad8                                   # whole batch, full-array block
    else:
        b_tile = 16
        for t in (512, 256, 128, 64, 32, 16):
            if t <= b_pad8 and size_fn(t) <= budget:
                b_tile = t
                break
    # v7x: guarantee >= 2 batch tiles for big batches so the "parallel" axis can
    # shard across both TensorCores.  Harmless on single-TC parts.
    if b_pad8 >= 256 and b_pad8 // b_tile < 2:
        b_tile = max(128, _round_up((b_pad8 + 1) // 2, 16))
    return b_tile


# --------------------------------------------------------------------- wrapper
def mlp_large_forward(x, w_hid, b_hid, w_out, b_out, *, vocab_len,
                      force_streamed=False):
    """x: [B, num_i].  Returns (out [B, 6, vocab_len], None, None)."""
    B, num_i = x.shape
    n_hidden, A_pad, _ = w_hid.shape
    O_pad = w_out.shape[1]
    out_dim = vocab_len * 6

    cap = _vmem_cap_bytes()
    budget = cap - (4 << 20)  # headroom for compiler-internal scratch / semaphores

    fused = (not force_streamed) and (
        _fused_vmem_bytes(16, n_hidden, A_pad, O_pad) <= budget // 2)

    size_fn = ((lambda t: _fused_vmem_bytes(t, n_hidden, A_pad, O_pad)) if fused
               else (lambda t: _streamed_vmem_bytes(t, A_pad, O_pad)))
    B_tile = _choose_b_tile(B, size_fn, budget)
    B_pad = _round_up(B, B_tile)

    # x.float() as in the PyTorch module; the MXU consumes bf16 operands, so the
    # activation is rounded to bf16 here (accumulation stays f32 in the kernel).
    x_pad = (jnp.zeros((B_pad, A_pad), jnp.bfloat16)
             .at[:B, :num_i].set(x.astype(jnp.float32).astype(jnp.bfloat16)))

    vmem_limit = int(min(cap, 1.3 * size_fn(B_tile) + (4 << 20)))

    if fused:
        out = pl.pallas_call(
            _mlp_fused_kernel,
            out_shape=jax.ShapeDtypeStruct((B_pad, O_pad), jnp.float32),
            grid=(B_pad // B_tile,),
            in_specs=[
                pl.BlockSpec((B_tile, A_pad), lambda b: (b, 0)),
                pl.BlockSpec((n_hidden, A_pad, A_pad), lambda b: (0, 0, 0)),
                pl.BlockSpec((n_hidden, 1, A_pad), lambda b: (0, 0, 0)),
                pl.BlockSpec((A_pad, O_pad), lambda b: (0, 0)),
                pl.BlockSpec((1, O_pad), lambda b: (0, 0)),
            ],
            out_specs=pl.BlockSpec((B_tile, O_pad), lambda b: (b, 0)),
            compiler_params=pltpu.CompilerParams(
                dimension_semantics=("parallel",),
                vmem_limit_bytes=vmem_limit,
            ),
        )(x_pad, w_hid, b_hid, w_out, b_out)
    else:
        n_layers = n_hidden + 1
        last_hidden = n_hidden - 1
        out = pl.pallas_call(
            _mlp_streamed_kernel,
            out_shape=jax.ShapeDtypeStruct((B_pad, O_pad), jnp.float32),
            grid=(B_pad // B_tile, n_layers),
            in_specs=[
                # x: resident per batch tile (constant over the layer axis)
                pl.BlockSpec((B_tile, A_pad), lambda b, l: (b, 0)),
                # hidden weights / biases: streamed one layer per step (clamped at end)
                pl.BlockSpec((1, A_pad, A_pad),
                             lambda b, l: (jnp.minimum(l, last_hidden), 0, 0)),
                pl.BlockSpec((1, 1, A_pad),
                             lambda b, l: (jnp.minimum(l, last_hidden), 0, 0)),
                # output layer params: constant index -> fetched once per core
                pl.BlockSpec((A_pad, O_pad), lambda b, l: (0, 0)),
                pl.BlockSpec((1, O_pad), lambda b, l: (0, 0)),
            ],
            out_specs=pl.BlockSpec((B_tile, O_pad), lambda b, l: (b, 0)),
            scratch_shapes=[pltpu.VMEM((B_tile, A_pad), jnp.bfloat16)],
            compiler_params=pltpu.CompilerParams(
                dimension_semantics=("parallel", "arbitrary"),
                vmem_limit_bytes=vmem_limit,
            ),
        )(x_pad, w_hid, b_hid, w_out, b_out)

    # Glue: drop padding and reshape exactly as the PyTorch module does.
    out = out[:B, :out_dim].reshape(B, 6, vocab_len)
    return out, None, None


# ------------------------------------------------------------------------- init
def init_params(key, num_i, num_h, vocab_len):
    """torch.nn.Linear-style U(-1/sqrt(fan_in), 1/sqrt(fan_in)) init.

    Weights stored as [in, out] (transpose of PyTorch's [out, in]); biases as [out].
    """
    dims_in = [num_i] + [num_h] * 8
    dims_out = [num_h] * 8 + [vocab_len * 6]
    weights, biases = [], []
    for fan_in, fan_out in zip(dims_in, dims_out):
        key, kw, kb = jax.random.split(key, 3)
        bound = 1.0 / jnp.sqrt(fan_in)
        weights.append(jax.random.uniform(kw, (fan_in, fan_out), jnp.float32, -bound, bound))
        biases.append(jax.random.uniform(kb, (fan_out,), jnp.float32, -bound, bound))
    return weights, biases


if __name__ == "__main__":
    batch = 8
    num_i = 32
    num_h = 32
    vocab_len = 16

    key = jax.random.PRNGKey(0)
    key, kx = jax.random.split(key)
    x = jax.random.normal(kx, (batch, num_i), jnp.float32)

    weights, biases = init_params(key, num_i, num_h, vocab_len)
    packed = pack_params(weights, biases)  # one-time prep outside the jitted forward

    # Pure-JAX reference with the SAME bf16 weight/activation rounding + f32 accumulate.
    h = x.astype(jnp.float32)
    for i, (w, b) in enumerate(zip(weights, biases)):
        h = jnp.dot(h.astype(jnp.bfloat16), w.astype(jnp.bfloat16),
                    preferred_element_type=jnp.float32) + b.reshape(1, -1)
        if i < len(weights) - 1:
            h = jnp.maximum(h, 0.0)
    ref = h.reshape(batch, 6, vocab_len)

    # Fused fast path (what this demo size uses).
    fwd = jax.jit(functools.partial(mlp_large_forward, vocab_len=vocab_len))
    out, _, _ = fwd(x, *packed)
    jax.block_until_ready(out)
    assert out.shape == (batch, 6, vocab_len), out.shape
    assert out.dtype == jnp.float32
    assert jnp.allclose(out, ref, atol=2e-2, rtol=2e-2), float(jnp.max(jnp.abs(out - ref)))

    # Layer-streamed path (what production-sized models use) -- parity check.
    fwd_s = jax.jit(functools.partial(mlp_large_forward, vocab_len=vocab_len,
                                      force_streamed=True))
    out_s, _, _ = fwd_s(x, *packed)
    jax.block_until_ready(out_s)
    assert out_s.shape == (batch, 6, vocab_len), out_s.shape
    assert jnp.allclose(out_s, ref, atol=2e-2, rtol=2e-2), float(jnp.max(jnp.abs(out_s - ref)))

    print("KERNEL_OK")
</pallas_src>

<mosaic_0001>
module attributes {stable_mosaic.version = 11 : i64} {
  func.func @_mlp_fused_kernel(%arg0: i32, %arg1: memref<8x128xbf16, #tpu.memory_space<vmem>>, %arg2: memref<8x128x128xbf16, #tpu.memory_space<vmem>>, %arg3: memref<8x1x128xf32, #tpu.memory_space<vmem>>, %arg4: memref<128x128xbf16, #tpu.memory_space<vmem>>, %arg5: memref<1x128xf32, #tpu.memory_space<vmem>>, %arg6: memref<8x128xf32, #tpu.memory_space<vmem>>) attributes {dimension_semantics = [#tpu.dimension_semantics<parallel>], iteration_bounds = array<i64: 1>, scalar_prefetch = 0 : i64, scratch_operands = 0 : i64, tpu.core_type = #tpu.core_type<tc>, window_params = [{transform_indices = @transform_0, window_bounds = array<i64: 8, 128>}, {pipeline_mode = #tpu.pipeline_mode<synchronous>, transform_indices = @transform_1, window_bounds = array<i64: 8, 128, 128>}, {pipeline_mode = #tpu.pipeline_mode<synchronous>, transform_indices = @transform_2, window_bounds = array<i64: 8, 1, 128>}, {pipeline_mode = #tpu.pipeline_mode<synchronous>, transform_indices = @transform_3, window_bounds = array<i64: 128, 128>}, {pipeline_mode = #tpu.pipeline_mode<synchronous>, transform_indices = @transform_4, window_bounds = array<i64: 1, 128>}, {transform_indices = @transform_5, window_bounds = array<i64: 8, 128>}]} {
    %c0 = arith.constant 0 : index
    %c0_0 = arith.constant 0 : index
    %0 = vector.load %arg1[%c0, %c0_0] : memref<8x128xbf16, #tpu.memory_space<vmem>>, vector<8x128xbf16>
    %c0_1 = arith.constant 0 : index
    %c0_2 = arith.constant 0 : index
    %c0_3 = arith.constant 0 : index
    %1 = vector.load %arg2[%c0_1, %c0_2, %c0_3] : memref<8x128x128xbf16, #tpu.memory_space<vmem>>, vector<1x128x128xbf16>
    %2 = vector.shape_cast %1 : vector<1x128x128xbf16> to vector<128x128xbf16>
    %cst = arith.constant dense<0.000000e+00> : vector<8x128xf32>
    %3 = tpu.matmul %0, %2, %cst {dimension_numbers = #tpu.dot_dimension_numbers<[1], [0], [0], [1], [0, 0, 1, 1], [], []>} : vector<8x128xbf16>, vector<128x128xbf16>, vector<8x128xf32> -> vector<8x128xf32>
    %c0_4 = arith.constant 0 : index
    %c0_5 = arith.constant 0 : index
    %c0_6 = arith.constant 0 : index
    %4 = vector.load %arg3[%c0_4, %c0_5, %c0_6] : memref<8x1x128xf32, #tpu.memory_space<vmem>>, vector<1x1x128xf32>
    %5 = vector.shape_cast %4 : vector<1x1x128xf32> to vector<1x128xf32>
    %6 = vector.broadcast %5 : vector<1x128xf32> to vector<8x128xf32>
    %7 = arith.addf %3, %6 : vector<8x128xf32>
    %cst_7 = arith.constant 0.000000e+00 : f32
    %8 = vector.broadcast %cst_7 : f32 to vector<8x128xf32>
    %9 = arith.maximumf %7, %8 : vector<8x128xf32>
    %10 = arith.truncf %9 : vector<8x128xf32> to vector<8x128xbf16>
    %c1 = arith.constant 1 : index
    %c0_8 = arith.constant 0 : index
    %c0_9 = arith.constant 0 : index
    %11 = vector.load %arg2[%c1, %c0_8, %c0_9] : memref<8x128x128xbf16, #tpu.memory_space<vmem>>, vector<1x128x128xbf16>
    %12 = vector.shape_cast %11 : vector<1x128x128xbf16> to vector<128x128xbf16>
    %cst_10 = arith.constant dense<0.000000e+00> : vector<8x128xf32>
    %13 = tpu.matmul %10, %12, %cst_10 {dimension_numbers = #tpu.dot_dimension_numbers<[1], [0], [0], [1], [0, 0, 1, 1], [], []>} : vector<8x128xbf16>, vector<128x128xbf16>, vector<8x128xf32> -> vector<8x128xf32>
    %c1_11 = arith.constant 1 : index
    %c0_12 = arith.constant 0 : index
    %c0_13 = arith.constant 0 : index
    %14 = vector.load %arg3[%c1_11, %c0_12, %c0_13] : memref<8x1x128xf32, #tpu.memory_space<vmem>>, vector<1x1x128xf32>
    %15 = vector.shape_cast %14 : vector<1x1x128xf32> to vector<1x128xf32>
    %16 = vector.broadcast %15 : vector<1x128xf32> to vector<8x128xf32>
    %17 = arith.addf %13, %16 : vector<8x128xf32>
    %cst_14 = arith.constant 0.000000e+00 : f32
    %18 = vector.broadcast %cst_14 : f32 to vector<8x128xf32>
    %19 = arith.maximumf %17, %18 : vector<8x128xf32>
    %20 = arith.truncf %19 : vector<8x128xf32> to vector<8x128xbf16>
    %c2 = arith.constant 2 : index
    %c0_15 = arith.constant 0 : index
    %c0_16 = arith.constant 0 : index
    %21 = vector.load %arg2[%c2, %c0_15, %c0_16] : memref<8x128x128xbf16, #tpu.memory_space<vmem>>, vector<1x128x128xbf16>
    %22 = vector.shape_cast %21 : vector<1x128x128xbf16> to vector<128x128xbf16>
    %cst_17 = arith.constant dense<0.000000e+00> : vector<8x128xf32>
    %23 = tpu.matmul %20, %22, %cst_17 {dimension_numbers = #tpu.dot_dimension_numbers<[1], [0], [0], [1], [0, 0, 1, 1], [], []>} : vector<8x128xbf16>, vector<128x128xbf16>, vector<8x128xf32> -> vector<8x128xf32>
    %c2_18 = arith.constant 2 : index
    %c0_19 = arith.constant 0 : index
    %c0_20 = arith.constant 0 : index
    %24 = vector.load %arg3[%c2_18, %c0_19, %c0_20] : memref<8x1x128xf32, #tpu.memory_space<vmem>>, vector<1x1x128xf32>
    %25 = vector.shape_cast %24 : vector<1x1x128xf32> to vector<1x128xf32>
    %26 = vector.broadcast %25 : vector<1x128xf32> to vector<8x128xf32>
    %27 = arith.addf %23, %26 : vector<8x128xf32>
    %cst_21 = arith.constant 0.000000e+00 : f32
    %28 = vector.broadcast %cst_21 : f32 to vector<8x128xf32>
    %29 = arith.maximumf %27, %28 : vector<8x128xf32>
    %30 = arith.truncf %29 : vector<8x128xf32> to vector<8x128xbf16>
    %c3 = arith.constant 3 : index
    %c0_22 = arith.constant 0 : index
    %c0_23 = arith.constant 0 : index
    %31 = vector.load %arg2[%c3, %c0_22, %c0_23] : memref<8x128x128xbf16, #tpu.memory_space<vmem>>, vector<1x128x128xbf16>
    %32 = vector.shape_cast %31 : vector<1x128x128xbf16> to vector<128x128xbf16>
    %cst_24 = arith.constant dense<0.000000e+00> : vector<8x128xf32>
    %33 = tpu.matmul %30, %32, %cst_24 {dimension_numbers = #tpu.dot_dimension_numbers<[1], [0], [0], [1], [0, 0, 1, 1], [], []>} : vector<8x128xbf16>, vector<128x128xbf16>, vector<8x128xf32> -> vector<8x128xf32>
    %c3_25 = arith.constant 3 : index
    %c0_26 = arith.constant 0 : index
    %c0_27 = arith.constant 0 : index
    %34 = vector.load %arg3[%c3_25, %c0_26, %c0_27] : memref<8x1x128xf32, #tpu.memory_space<vmem>>, vector<1x1x128xf32>
    %35 = vector.shape_cast %34 : vector<1x1x128xf32> to vector<1x128xf32>
    %36 = vector.broadcast %35 : vector<1x128xf32> to vector<8x128xf32>
    %37 = arith.addf %33, %36 : vector<8x128xf32>
    %cst_28 = arith.constant 0.000000e+00 : f32
    %38 = vector.broadcast %cst_28 : f32 to vector<8x128xf32>
    %39 = arith.maximumf %37, %38 : vector<8x128xf32>
    %40 = arith.truncf %39 : vector<8x128xf32> to vector<8x128xbf16>
    %c4 = arith.constant 4 : index
    %c0_29 = arith.constant 0 : index
    %c0_30 = arith.constant 0 : index
    %41 = vector.load %arg2[%c4, %c0_29, %c0_30] : memref<8x128x128xbf16, #tpu.memory_space<vmem>>, vector<1x128x128xbf16>
    %42 = vector.shape_cast %41 : vector<1x128x128xbf16> to vector<128x128xbf16>
    %cst_31 = arith.constant dense<0.000000e+00> : vector<8x128xf32>
    %43 = tpu.matmul %40, %42, %cst_31 {dimension_numbers = #tpu.dot_dimension_numbers<[1], [0], [0], [1], [0, 0, 1, 1], [], []>} : vector<8x128xbf16>, vector<128x128xbf16>, vector<8x128xf32> -> vector<8x128xf32>
    %c4_32 = arith.constant 4 : index
    %c0_33 = arith.constant 0 : index
    %c0_34 = arith.constant 0 : index
    %44 = vector.load %arg3[%c4_32, %c0_33, %c0_34] : memref<8x1x128xf32, #tpu.memory_space<vmem>>, vector<1x1x128xf32>
    %45 = vector.shape_cast %44 : vector<1x1x128xf32> to vector<1x128xf32>
    %46 = vector.broadcast %45 : vector<1x128xf32> to vector<8x128xf32>
    %47 = arith.addf %43, %46 : vector<8x128xf32>
    %cst_35 = arith.constant 0.000000e+00 : f32
    %48 = vector.broadcast %cst_35 : f32 to vector<8x128xf32>
    %49 = arith.maximumf %47, %48 : vector<8x128xf32>
    %50 = arith.truncf %49 : vector<8x128xf32> to vector<8x128xbf16>
    %c5 = arith.constant 5 : index
    %c0_36 = arith.constant 0 : index
    %c0_37 = arith.constant 0 : index
    %51 = vector.load %arg2[%c5, %c0_36, %c0_37] : memref<8x128x128xbf16, #tpu.memory_space<vmem>>, vector<1x128x128xbf16>
    %52 = vector.shape_cast %51 : vector<1x128x128xbf16> to vector<128x128xbf16>
    %cst_38 = arith.constant dense<0.000000e+00> : vector<8x128xf32>
    %53 = tpu.matmul %50, %52, %cst_38 {dimension_numbers = #tpu.dot_dimension_numbers<[1], [0], [0], [1], [0, 0, 1, 1], [], []>} : vector<8x128xbf16>, vector<128x128xbf16>, vector<8x128xf32> -> vector<8x128xf32>
    %c5_39 = arith.constant 5 : index
    %c0_40 = arith.constant 0 : index
    %c0_41 = arith.constant 0 : index
    %54 = vector.load %arg3[%c5_39, %c0_40, %c0_41] : memref<8x1x128xf32, #tpu.memory_space<vmem>>, vector<1x1x128xf32>
    %55 = vector.shape_cast %54 : vector<1x1x128xf32> to vector<1x128xf32>
    %56 = vector.broadcast %55 : vector<1x128xf32> to vector<8x128xf32>
    %57 = arith.addf %53, %56 : vector<8x128xf32>
    %cst_42 = arith.constant 0.000000e+00 : f32
    %58 = vector.broadcast %cst_42 : f32 to vector<8x128xf32>
    %59 = arith.maximumf %57, %58 : vector<8x128xf32>
    %60 = arith.truncf %59 : vector<8x128xf32> to vector<8x128xbf16>
    %c6 = arith.constant 6 : index
    %c0_43 = arith.constant 0 : index
    %c0_44 = arith.constant 0 : index
    %61 = vector.load %arg2[%c6, %c0_43, %c0_44] : memref<8x128x128xbf16, #tpu.memory_space<vmem>>, vector<1x128x128xbf16>
    %62 = vector.shape_cast %61 : vector<1x128x128xbf16> to vector<128x128xbf16>
    %cst_45 = arith.constant dense<0.000000e+00> : vector<8x128xf32>
    %63 = tpu.matmul %60, %62, %cst_45 {dimension_numbers = #tpu.dot_dimension_numbers<[1], [0], [0], [1], [0, 0, 1, 1], [], []>} : vector<8x128xbf16>, vector<128x128xbf16>, vector<8x128xf32> -> vector<8x128xf32>
    %c6_46 = arith.constant 6 : index
    %c0_47 = arith.constant 0 : index
    %c0_48 = arith.constant 0 : index
    %64 = vector.load %arg3[%c6_46, %c0_47, %c0_48] : memref<8x1x128xf32, #tpu.memory_space<vmem>>, vector<1x1x128xf32>
    %65 = vector.shape_cast %64 : vector<1x1x128xf32> to vector<1x128xf32>
    %66 = vector.broadcast %65 : vector<1x128xf32> to vector<8x128xf32>
    %67 = arith.addf %63, %66 : vector<8x128xf32>
    %cst_49 = arith.constant 0.000000e+00 : f32
    %68 = vector.broadcast %cst_49 : f32 to vector<8x128xf32>
    %69 = arith.maximumf %67, %68 : vector<8x128xf32>
    %70 = arith.truncf %69 : vector<8x128xf32> to vector<8x128xbf16>
    %c7 = arith.constant 7 : index
    %c0_50 = arith.constant 0 : index
    %c0_51 = arith.constant 0 : index
    %71 = vector.load %arg2[%c7, %c0_50, %c0_51] : memref<8x128x128xbf16, #tpu.memory_space<vmem>>, vector<1x128x128xbf16>
    %72 = vector.shape_cast %71 : vector<1x128x128xbf16> to vector<128x128xbf16>
    %cst_52 = arith.constant dense<0.000000e+00> : vector<8x128xf32>
    %73 = tpu.matmul %70, %72, %cst_52 {dimension_numbers = #tpu.dot_dimension_numbers<[1], [0], [0], [1], [0, 0, 1, 1], [], []>} : vector<8x128xbf16>, vector<128x128xbf16>, vector<8x128xf32> -> vector<8x128xf32>
    %c7_53 = arith.constant 7 : index
    %c0_54 = arith.constant 0 : index
    %c0_55 = arith.constant 0 : index
    %74 = vector.load %arg3[%c7_53, %c0_54, %c0_55] : memref<8x1x128xf32, #tpu.memory_space<vmem>>, vector<1x1x128xf32>
    %75 = vector.shape_cast %74 : vector<1x1x128xf32> to vector<1x128xf32>
    %76 = vector.broadcast %75 : vector<1x128xf32> to vector<8x128xf32>
    %77 = arith.addf %73, %76 : vector<8x128xf32>
    %cst_56 = arith.constant 0.000000e+00 : f32
    %78 = vector.broadcast %cst_56 : f32 to vector<8x128xf32>
    %79 = arith.maximumf %77, %78 : vector<8x128xf32>
    %80 = arith.truncf %79 : vector<8x128xf32> to vector<8x128xbf16>
    %c0_57 = arith.constant 0 : index
    %c0_58 = arith.constant 0 : index
    %81 = vector.load %arg4[%c0_57, %c0_58] : memref<128x128xbf16, #tpu.memory_space<vmem>>, vector<128x128xbf16>
    %cst_59 = arith.constant dense<0.000000e+00> : vector<8x128xf32>
    %82 = tpu.matmul %80, %81, %cst_59 {dimension_numbers = #tpu.dot_dimension_numbers<[1], [0], [0], [1], [0, 0, 1, 1], [], []>} : vector<8x128xbf16>, vector<128x128xbf16>, vector<8x128xf32> -> vector<8x128xf32>
    %c0_60 = arith.constant 0 : index
    %c0_61 = arith.constant 0 : index
    %83 = vector.load %arg5[%c0_60, %c0_61] : memref<1x128xf32, #tpu.memory_space<vmem>>, vector<1x128xf32>
    %84 = vector.broadcast %83 : vector<1x128xf32> to vector<8x128xf32>
    %85 = arith.addf %82, %84 : vector<8x128xf32>
    %c0_62 = arith.constant 0 : index
    %c0_63 = arith.constant 0 : index
    %86 = vector.load %arg6[%c0_62, %c0_63] : memref<8x128xf32, #tpu.memory_space<vmem>>, vector<8x128xf32>
    tpu.vector_store %arg6[%c0_62, %c0_63], %85 {strides = array<i32>} : memref<8x128xf32, #tpu.memory_space<vmem>>, vector<8x128xf32>,
    return
  }
  func.func @transform_0(%arg0: i32) -> (i32, i32) {
    %c0_i32 = arith.constant 0 : i32
    %c0_i32_0 = arith.constant 0 : i32
    return %arg0, %c0_i32 : i32, i32
  }
  func.func @transform_1(%arg0: i32) -> (i32, i32, i32) {
    %c0_i32 = arith.constant 0 : i32
    %c0_i32_0 = arith.constant 0 : i32
    %c0_i32_1 = arith.constant 0 : i32
    %c0_i32_2 = arith.constant 0 : i32
    return %c0_i32, %c0_i32_0, %c0_i32_1 : i32, i32, i32
  }
  func.func @transform_2(%arg0: i32) -> (i32, i32, i32) {
    %c0_i32 = arith.constant 0 : i32
    %c0_i32_0 = arith.constant 0 : i32
    %c0_i32_1 = arith.constant 0 : i32
    %c0_i32_2 = arith.constant 0 : i32
    return %c0_i32, %c0_i32_0, %c0_i32_1 : i32, i32, i32
  }
  func.func @transform_3(%arg0: i32) -> (i32, i32) {
    %c0_i32 = arith.constant 0 : i32
    %c0_i32_0 = arith.constant 0 : i32
    %c0_i32_1 = arith.constant 0 : i32
    return %c0_i32, %c0_i32_0 : i32, i32
  }
  func.func @transform_4(%arg0: i32) -> (i32, i32) {
    %c0_i32 = arith.constant 0 : i32
    %c0_i32_0 = arith.constant 0 : i32
    %c0_i32_1 = arith.constant 0 : i32
    return %c0_i32, %c0_i32_0 : i32, i32
  }
  func.func @transform_5(%arg0: i32) -> (i32, i32) {
    %c0_i32 = arith.constant 0 : i32
    %c0_i32_0 = arith.constant 0 : i32
    return %arg0, %c0_i32 : i32, i32
  }
}

</mosaic_0001>

<llo_original>
// kernel: mlp_large_forward.1
$region0: #{mlp_large_forward.1}
  #allocation0 [shape = 'u32[]', space=smem, size = 0x4, offset = 0x4, fixed_abs, tag = 'smem constant byte address 0x4 - core index']
  #allocation1 [shape = 'u32[144,128]{1,0:T(1,128)}', space=vmem, size = 0x12000, scoped, tag = 'internal scratch']
  %s0 = inlined_call_operand.vmem [shape: bf16[8,128], index: 0, kind: input, shape index: {}]
  %s1 = inlined_call_operand.hbm [shape: bf16[8,128,128], index: 1, kind: input, shape index: {}]
  %s2 = inlined_call_operand.vmem [shape: f32[8,1,128], index: 2, kind: input, shape index: {}]
  %s3 = inlined_call_operand.hbm [shape: bf16[128,128], index: 3, kind: input, shape index: {}]
  %s4 = inlined_call_operand.vmem [shape: f32[1,128], index: 4, kind: input, shape index: {}]
  %s5 = inlined_call_operand.vmem [shape: f32[8,128], index: 5, kind: output, shape index: {}]
  %s6 = sld [smem:[#allocation0]]
  $region38: #{mlp_large_forward.1} parent=0
    _
  %s8 = ssub.s32 1, %s6
  %s9 = scalar_select 0, %s8, %s6
  $region1: #{mlp_large_forward.1} parent=0
    #allocation2 [shape = 'u8[262144]{0}', space=vmem, size = 0x40000, scoped, tag = 'input window, operand 1, single buffered']
    #allocation3 [shape = 's32[1]{0}', space=sflag, size = 0x4, scoped, tag = 'scoped memory for mlp_large_forward.1']
    #allocation4 [shape = 'u8[32768]{0}', space=vmem, size = 0x8000, scoped, tag = 'input window, operand 3, single buffered']
    #allocation5 [shape = 's32[1]{0}', space=sflag, size = 0x4, scoped, tag = 'scoped memory for mlp_large_forward.1']
    %10 = vsyncpa [#allocation3], 0
    %11 = vsyncpa [#allocation5], 0
    // Predicated region
    $region2: #{mlp_large_forward.1} parent=1 // pred_check
      _
    $region3: #{mlp_large_forward.1} parent=1 // pred_check_branch
      %13 = sbr.rel (0) target = $region5
    $region4: #{mlp_large_forward.1} parent=1 // pred_region
      _
    $region5: #{mlp_large_forward.1} parent=1 // pred_fallthru
      _
    // Predicated region
    $region6: #{mlp_large_forward.1} parent=1 // pred_check
      _
    $region7: #{mlp_large_forward.1} parent=1 // pred_check_branch
      %15 = sbr.rel (0) target = $region9
    $region8: #{mlp_large_forward.1} parent=1 // pred_region
      %s17 = ssub.s32 8192, 8192
      %18 = vsyncadd [#allocation3], %s17
      %s19 = sshll.u32 [#allocation2], 4
      %s20 = int_to_ptr.vmem [resolvable:$true] %s19
      %25 = dma.hbm_to_vmem [thread:$0]  %s1, 8192, %s20, [#allocation3], 64, 64, 4
    $region9: #{mlp_large_forward.1} parent=1 // pred_fallthru
      _
    // Predicated region
    $region10: #{mlp_large_forward.1} parent=1 // pred_check
      _
    $region11: #{mlp_large_forward.1} parent=1 // pred_check_branch
      %27 = sbr.rel (0) target = $region13
    $region12: #{mlp_large_forward.1} parent=1 // pred_region
      _
    $region13: #{mlp_large_forward.1} parent=1 // pred_fallthru
      _
    // Predicated region
    $region14: #{mlp_large_forward.1} parent=1 // pred_check
      _
    $region15: #{mlp_large_forward.1} parent=1 // pred_check_branch
      %29 = sbr.rel (0) target = $region17
    $region16: #{mlp_large_forward.1} parent=1 // pred_region
      %s31 = ssub.s32 1024, 1024
      %32 = vsyncadd [#allocation5], %s31
      %s33 = sshll.u32 [#allocation4], 4
      %s34 = int_to_ptr.vmem [resolvable:$true] %s33
      %39 = dma.hbm_to_vmem [thread:$0]  %s3, 1024, %s34, [#allocation5], 64, 64, 4
    $region17: #{mlp_large_forward.1} parent=1 // pred_fallthru
      _
    // Predicated region
    $region18: #{mlp_large_forward.1} parent=1 // pred_check
      _
    $region19: #{mlp_large_forward.1} parent=1 // pred_check_branch
      %41 = sbr.rel (0) target = $region21
    $region20: #{mlp_large_forward.1} parent=1 // pred_region
      _
    $region21: #{mlp_large_forward.1} parent=1 // pred_fallthru
      _
    // Predicated region
    $region22: #{mlp_large_forward.1} parent=1 // pred_check
      _
    $region23: #{mlp_large_forward.1} parent=1 // pred_check_branch
      %43 = sbr.rel (0) target = $region25
    $region24: #{mlp_large_forward.1} parent=1 // pred_region
      %44 = dma.done [#allocation3], 8192
    $region25: #{mlp_large_forward.1} parent=1 // pred_fallthru
      _
    // Predicated region
    $region26: #{mlp_large_forward.1} parent=1 // pred_check
      _
    $region27: #{mlp_large_forward.1} parent=1 // pred_check_branch
      %46 = sbr.rel (0) target = $region29
    $region28: #{mlp_large_forward.1} parent=1 // pred_region
      %47 = dma.done [#allocation5], 1024
    $region29: #{mlp_large_forward.1} parent=1 // pred_fallthru
      _
    %v49 = vld [vmem:[%s0] sm:$0xf]
    %v50 = vld [vmem:[#allocation2] sm:$0xf]
    %v51 = vld [vmem:[#allocation2 + $0x4] sm:$0xf]
    %v52 = vld [vmem:[#allocation2 + $0x8] sm:$0xf]
    %v53 = vld [vmem:[#allocation2 + $0xc] sm:$0xf]
    %v54 = vld [vmem:[#allocation2 + $0x10] sm:$0xf]
    %v55 = vld [vmem:[#allocation2 + $0x14] sm:$0xf]
    %v56 = vld [vmem:[#allocation2 + $0x18] sm:$0xf]
    %v57 = vld [vmem:[#allocation2 + $0x1c] sm:$0xf]
    %v58 = vld [vmem:[#allocation2 + $0x20] sm:$0xf]
    %v59 = vld [vmem:[#allocation2 + $0x24] sm:$0xf]
    %v60 = vld [vmem:[#allocation2 + $0x28] sm:$0xf]
    %v61 = vld [vmem:[#allocation2 + $0x2c] sm:$0xf]
    %v62 = vld [vmem:[#allocation2 + $0x30] sm:$0xf]
    %v63 = vld [vmem:[#allocation2 + $0x34] sm:$0xf]
    %v64 = vld [vmem:[#allocation2 + $0x38] sm:$0xf]
    %v65 = vld [vmem:[#allocation2 + $0x3c] sm:$0xf]
    %v66 = vld [vmem:[%s2] sm:$0x1]
    %v68 = vlaneseq
    %v69 = vshrl.u32 %v68, 7
    %v70 = vsub.s32 0, %v69
    %v71 = vrot.slane %v66, %v70
    %v89 = vunpack.c.l.b16 %v50
    %v90 = vunpack.c.l.b16 %v51
    %v91 = vunpack.c.l.b16 %v52
    %v92 = vunpack.c.l.b16 %v53
    %v93 = vunpack.c.l.b16 %v54
    %v94 = vunpack.c.l.b16 %v55
    %v95 = vunpack.c.l.b16 %v56
    %v96 = vunpack.c.l.b16 %v57
    %v97 = vunpack.c.l.b16 %v58
    %v98 = vunpack.c.l.b16 %v59
    %v99 = vunpack.c.l.b16 %v60
    %v100 = vunpack.c.l.b16 %v61
    %v101 = vunpack.c.l.b16 %v62
    %v102 = vunpack.c.l.b16 %v63
    %v103 = vunpack.c.l.b16 %v64
    %v104 = vunpack.c.l.b16 %v65
    %v105 = vpack.c.b16 %v90, %v89
    %v106 = vpack.c.b16 %v92, %v91
    %v107 = vpack.c.b16 %v94, %v93
    %v108 = vpack.c.b16 %v96, %v95
    %v109 = vpack.c.b16 %v98, %v97
    %v110 = vpack.c.b16 %v100, %v99
    %v111 = vpack.c.b16 %v102, %v101
    %v112 = vpack.c.b16 %v104, %v103
    %121 = vmatprep.subr.bf16.mxu0 0
    %122 = vmatpush1.bf16.msra.mxu0 %v105
    %123 = vmatprep.subr.bf16.mxu0 0
    %124 = vmatpush1.bf16.msra.mxu0 %v106
    %125 = vmatprep.subr.bf16.mxu0 0
    %126 = vmatpush1.bf16.msra.mxu0 %v107
    %127 = vmatprep.subr.bf16.mxu0 0
    %128 = vmatpush1.bf16.msra.mxu0 %v108
    %129 = vmatprep.subr.bf16.mxu0 0
    %130 = vmatpush1.bf16.msra.mxu0 %v109
    %131 = vmatprep.subr.bf16.mxu0 0
    %132 = vmatpush1.bf16.msra.mxu0 %v110
    %133 = vmatprep.subr.bf16.mxu0 0
    %134 = vmatpush1.bf16.msra.mxu0 %v111
    %135 = vmatprep.subr.bf16.mxu0 0
    %136 = vmatpush1.bf16.msra.mxu0 %v112
    %137 = vmatprep.subr.bf16.mxu0 0
    %138 = vmatpush1.bf16.msra.mxu0 0
    %139 = vmatprep.subr.bf16.mxu0 0
    %140 = vmatpush1.bf16.msra.mxu0 0
    %141 = vmatprep.subr.bf16.mxu0 0
    %142 = vmatpush1.bf16.msra.mxu0 0
    %143 = vmatprep.subr.bf16.mxu0 0
    %144 = vmatpush1.bf16.msra.mxu0 0
    %145 = vmatprep.subr.bf16.mxu0 0
    %146 = vmatpush1.bf16.msra.mxu0 0
    %147 = vmatprep.subr.bf16.mxu0 0
    %148 = vmatpush1.bf16.msra.mxu0 0
    %149 = vmatprep.subr.bf16.mxu0 0
    %150 = vmatpush1.bf16.msra.mxu0 0
    %151 = vmatprep.subr.bf16.mxu0 0
    %152 = vmatpush1.bf16.msra.mxu0 0
    %153 = vmatprep.mubr.bf16.mxu0 0
    %154 = vmatmul.mubr.bf16.gmra.mrb[0].mxu0 %v49
    %v155 = vpop.f32.mrb[0].mxu0
    %v156 = vadd.f32 %v71, %v155
    %v157 = vpop.f32.mrb[0].mxu0
    %v158 = vpop.f32.mrb[0].mxu0
    %v159 = vpop.f32.mrb[0].mxu0
    %160 = vdwg.mxu0
    %v161 = vmax.f32 %v156, 0.0
    %v162 = vpack.c.bf16 %v161, %v161
    %s163 = scalar_lea.vmem [#allocation2], 64
    %v164 = vld [vmem:[%s163] sm:$0xf]
    %v165 = vld [vmem:[%s163 + $0x4] sm:$0xf]
    %v166 = vld [vmem:[%s163 + $0x8] sm:$0xf]
    %v167 = vld [vmem:[%s163 + $0xc] sm:$0xf]
    %v168 = vld [vmem:[%s163 + $0x10] sm:$0xf]
    %v169 = vld [vmem:[%s163 + $0x14] sm:$0xf]
    %v170 = vld [vmem:[%s163 + $0x18] sm:$0xf]
    %v171 = vld [vmem:[%s163 + $0x1c] sm:$0xf]
    %v172 = vld [vmem:[%s163 + $0x20] sm:$0xf]
    %v173 = vld [vmem:[%s163 + $0x24] sm:$0xf]
    %v174 = vld [vmem:[%s163 + $0x28] sm:$0xf]
    %v175 = vld [vmem:[%s163 + $0x2c] sm:$0xf]
    %v176 = vld [vmem:[%s163 + $0x30] sm:$0xf]
    %v177 = vld [vmem:[%s163 + $0x34] sm:$0xf]
    %v178 = vld [vmem:[%s163 + $0x38] sm:$0xf]
    %v179 = vld [vmem:[%s163 + $0x3c] sm:$0xf]
    %s180 = scalar_lea.vmem %s2, 1
    %v181 = vld [vmem:[%s180] sm:$0x1]
    %v183 = vlaneseq
    %v184 = vshrl.u32 %v183, 7
    %v185 = vsub.s32 0, %v184
    %v186 = vrot.slane %v181, %v185
    %v204 = vunpack.c.l.b16 %v164
    %v205 = vunpack.c.l.b16 %v165
    %v206 = vunpack.c.l.b16 %v166
    %v207 = vunpack.c.l.b16 %v167
    %v208 = vunpack.c.l.b16 %v168
    %v209 = vunpack.c.l.b16 %v169
    %v210 = vunpack.c.l.b16 %v170
    %v211 = vunpack.c.l.b16 %v171
    %v212 = vunpack.c.l.b16 %v172
    %v213 = vunpack.c.l.b16 %v173
    %v214 = vunpack.c.l.b16 %v174
    %v215 = vunpack.c.l.b16 %v175
    %v216 = vunpack.c.l.b16 %v176
    %v217 = vunpack.c.l.b16 %v177
    %v218 = vunpack.c.l.b16 %v178
    %v219 = vunpack.c.l.b16 %v179
    %v220 = vpack.c.b16 %v205, %v204
    %v221 = vpack.c.b16 %v207, %v206
    %v222 = vpack.c.b16 %v209, %v208
    %v223 = vpack.c.b16 %v211, %v210
    %v224 = vpack.c.b16 %v213, %v212
    %v225 = vpack.c.b16 %v215, %v214
    %v226 = vpack.c.b16 %v217, %v216
    %v227 = vpack.c.b16 %v219, %v218
    %236 = vmatprep.subr.bf16.mxu0 0
    %237 = vmatpush1.bf16.msra.mxu0 %v220
    %238 = vmatprep.subr.bf16.mxu0 0
    %239 = vmatpush1.bf16.msra.mxu0 %v221
    %240 = vmatprep.subr.bf16.mxu0 0
    %241 = vmatpush1.bf16.msra.mxu0 %v222
    %242 = vmatprep.subr.bf16.mxu0 0
    %243 = vmatpush1.bf16.msra.mxu0 %v223
    %244 = vmatprep.subr.bf16.mxu0 0
    %245 = vmatpush1.bf16.msra.mxu0 %v224
    %246 = vmatprep.subr.bf16.mxu0 0
    %247 = vmatpush1.bf16.msra.mxu0 %v225
    %248 = vmatprep.subr.bf16.mxu0 0
    %249 = vmatpush1.bf16.msra.mxu0 %v226
    %250 = vmatprep.subr.bf16.mxu0 0
    %251 = vmatpush1.bf16.msra.mxu0 %v227
    %252 = vmatprep.subr.bf16.mxu0 0
    %253 = vmatpush1.bf16.msra.mxu0 0
    %254 = vmatprep.subr.bf16.mxu0 0
    %255 = vmatpush1.bf16.msra.mxu0 0
    %256 = vmatprep.subr.bf16.mxu0 0
    %257 = vmatpush1.bf16.msra.mxu0 0
    %258 = vmatprep.subr.bf16.mxu0 0
    %259 = vmatpush1.bf16.msra.mxu0 0
    %260 = vmatprep.subr.bf16.mxu0 0
    %261 = vmatpush1.bf16.msra.mxu0 0
    %262 = vmatprep.subr.bf16.mxu0 0
    %263 = vmatpush1.bf16.msra.mxu0 0
    %264 = vmatprep.subr.bf16.mxu0 0
    %265 = vmatpush1.bf16.msra.mxu0 0
    %266 = vmatprep.subr.bf16.mxu0 0
    %267 = vmatpush1.bf16.msra.mxu0 0
    %268 = vmatprep.mubr.bf16.mxu0 0
    %269 = vmatmul.mubr.bf16.gmra.mrb[0].mxu0 %v162
    %v270 = vpop.f32.mrb[0].mxu0
    %v271 = vadd.f32 %v186, %v270
    %v272 = vpop.f32.mrb[0].mxu0
    %v273 = vpop.f32.mrb[0].mxu0
    %v274 = vpop.f32.mrb[0].mxu0
    %275 = vdwg.mxu0
    %v276 = vmax.f32 %v271, 0.0
    %v277 = vpack.c.bf16 %v276, %v276
    %s278 = scalar_lea.vmem [#allocation2], 128
    %v279 = vld [vmem:[%s278] sm:$0xf]
    %v280 = vld [vmem:[%s278 + $0x4] sm:$0xf]
    %v281 = vld [vmem:[%s278 + $0x8] sm:$0xf]
    %v282 = vld [vmem:[%s278 + $0xc] sm:$0xf]
    %v283 = vld [vmem:[%s278 + $0x10] sm:$0xf]
    %v284 = vld [vmem:[%s278 + $0x14] sm:$0xf]
    %v285 = vld [vmem:[%s278 + $0x18] sm:$0xf]
    %v286 = vld [vmem:[%s278 + $0x1c] sm:$0xf]
    %v287 = vld [vmem:[%s278 + $0x20] sm:$0xf]
    %v288 = vld [vmem:[%s278 + $0x24] sm:$0xf]
    %v289 = vld [vmem:[%s278 + $0x28] sm:$0xf]
    %v290 = vld [vmem:[%s278 + $0x2c] sm:$0xf]
    %v291 = vld [vmem:[%s278 + $0x30] sm:$0xf]
    %v292 = vld [vmem:[%s278 + $0x34] sm:$0xf]
    %v293 = vld [vmem:[%s278 + $0x38] sm:$0xf]
    %v294 = vld [vmem:[%s278 + $0x3c] sm:$0xf]
    %s295 = scalar_lea.vmem %s2, 2
    %v296 = vld [vmem:[%s295] sm:$0x1]
    %v298 = vlaneseq
    %v299 = vshrl.u32 %v298, 7
    %v300 = vsub.s32 0, %v299
    %v301 = vrot.slane %v296, %v300
    %v319 = vunpack.c.l.b16 %v279
    %v320 = vunpack.c.l.b16 %v280
    %v321 = vunpack.c.l.b16 %v281
    %v322 = vunpack.c.l.b16 %v282
    %v323 = vunpack.c.l.b16 %v283
    %v324 = vunpack.c.l.b16 %v284
    %v325 = vunpack.c.l.b16 %v285
    %v326 = vunpack.c.l.b16 %v286
    %v327 = vunpack.c.l.b16 %v287
    %v328 = vunpack.c.l.b16 %v288
    %v329 = vunpack.c.l.b16 %v289
    %v330 = vunpack.c.l.b16 %v290
    %v331 = vunpack.c.l.b16 %v291
    %v332 = vunpack.c.l.b16 %v292
    %v333 = vunpack.c.l.b16 %v293
    %v334 = vunpack.c.l.b16 %v294
    %v335 = vpack.c.b16 %v320, %v319
    %v336 = vpack.c.b16 %v322, %v321
    %v337 = vpack.c.b16 %v324, %v323
    %v338 = vpack.c.b16 %v326, %v325
    %v339 = vpack.c.b16 %v328, %v327
    %v340 = vpack.c.b16 %v330, %v329
    %v341 = vpack.c.b16 %v332, %v331
    %v342 = vpack.c.b16 %v334, %v333
    %351 = vmatprep.subr.bf16.mxu0 0
    %352 = vmatpush1.bf16.msra.mxu0 %v335
    %353 = vmatprep.subr.bf16.mxu0 0
    %354 = vmatpush1.bf16.msra.mxu0 %v336
    %355 = vmatprep.subr.bf16.mxu0 0
    %356 = vmatpush1.bf16.msra.mxu0 %v337
    %357 = vmatprep.subr.bf16.mxu0 0
    %358 = vmatpush1.bf16.msra.mxu0 %v338
    %359 = vmatprep.subr.bf16.mxu0 0
    %360 = vmatpush1.bf16.msra.mxu0 %v339
    %361 = vmatprep.subr.bf16.mxu0 0
    %362 = vmatpush1.bf16.msra.mxu0 %v340
    %363 = vmatprep.subr.bf16.mxu0 0
    %364 = vmatpush1.bf16.msra.mxu0 %v341
    %365 = vmatprep.subr.bf16.mxu0 0
    %366 = vmatpush1.bf16.msra.mxu0 %v342
    %367 = vmatprep.subr.bf16.mxu0 0
    %368 = vmatpush1.bf16.msra.mxu0 0
    %369 = vmatprep.subr.bf16.mxu0 0
    %370 = vmatpush1.bf16.msra.mxu0 0
    %371 = vmatprep.subr.bf16.mxu0 0
    %372 = vmatpush1.bf16.msra.mxu0 0
    %373 = vmatprep.subr.bf16.mxu0 0
    %374 = vmatpush1.bf16.msra.mxu0 0
    %375 = vmatprep.subr.bf16.mxu0 0
    %376 = vmatpush1.bf16.msra.mxu0 0
    %377 = vmatprep.subr.bf16.mxu0 0
    %378 = vmatpush1.bf16.msra.mxu0 0
    %379 = vmatprep.subr.bf16.mxu0 0
    %380 = vmatpush1.bf16.msra.mxu0 0
    %381 = vmatprep.subr.bf16.mxu0 0
    %382 = vmatpush1.bf16.msra.mxu0 0
    %383 = vmatprep.mubr.bf16.mxu0 0
    %384 = vmatmul.mubr.bf16.gmra.mrb[0].mxu0 %v277
    %v385 = vpop.f32.mrb[0].mxu0
    %v386 = vadd.f32 %v301, %v385
    %v387 = vpop.f32.mrb[0].mxu0
    %v388 = vpop.f32.mrb[0].mxu0
    %v389 = vpop.f32.mrb[0].mxu0
    %390 = vdwg.mxu0
    %v391 = vmax.f32 %v386, 0.0
    %v392 = vpack.c.bf16 %v391, %v391
    %s393 = scalar_lea.vmem [#allocation2], 192
    %v394 = vld [vmem:[%s393] sm:$0xf]
    %v395 = vld [vmem:[%s393 + $0x4] sm:$0xf]
    %v396 = vld [vmem:[%s393 + $0x8] sm:$0xf]
    %v397 = vld [vmem:[%s393 + $0xc] sm:$0xf]
    %v398 = vld [vmem:[%s393 + $0x10] sm:$0xf]
    %v399 = vld [vmem:[%s393 + $0x14] sm:$0xf]
    %v400 = vld [vmem:[%s393 + $0x18] sm:$0xf]
    %v401 = vld [vmem:[%s393 + $0x1c] sm:$0xf]
    %v402 = vld [vmem:[%s393 + $0x20] sm:$0xf]
    %v403 = vld [vmem:[%s393 + $0x24] sm:$0xf]
    %v404 = vld [vmem:[%s393 + $0x28] sm:$0xf]
    %v405 = vld [vmem:[%s393 + $0x2c] sm:$0xf]
    %v406 = vld [vmem:[%s393 + $0x30] sm:$0xf]
    %v407 = vld [vmem:[%s393 + $0x34] sm:$0xf]
    %v408 = vld [vmem:[%s393 + $0x38] sm:$0xf]
    %v409 = vld [vmem:[%s393 + $0x3c] sm:$0xf]
    %s410 = scalar_lea.vmem %s2, 3
    %v411 = vld [vmem:[%s410] sm:$0x1]
    %v413 = vlaneseq
    %v414 = vshrl.u32 %v413, 7
    %v415 = vsub.s32 0, %v414
    %v416 = vrot.slane %v411, %v415
    %v434 = vunpack.c.l.b16 %v394
    %v435 = vunpack.c.l.b16 %v395
    %v436 = vunpack.c.l.b16 %v396
    %v437 = vunpack.c.l.b16 %v397
    %v438 = vunpack.c.l.b16 %v398
    %v439 = vunpack.c.l.b16 %v399
    %v440 = vunpack.c.l.b16 %v400
    %v441 = vunpack.c.l.b16 %v401
    %v442 = vunpack.c.l.b16 %v402
    %v443 = vunpack.c.l.b16 %v403
    %v444 = vunpack.c.l.b16 %v404
    %v445 = vunpack.c.l.b16 %v405
    %v446 = vunpack.c.l.b16 %v406
    %v447 = vunpack.c.l.b16 %v407
    %v448 = vunpack.c.l.b16 %v408
    %v449 = vunpack.c.l.b16 %v409
    %v450 = vpack.c.b16 %v435, %v434
    %v451 = vpack.c.b16 %v437, %v436
    %v452 = vpack.c.b16 %v439, %v438
    %v453 = vpack.c.b16 %v441, %v440
    %v454 = vpack.c.b16 %v443, %v442
    %v455 = vpack.c.b16 %v445, %v444
    %v456 = vpack.c.b16 %v447, %v446
    %v457 = vpack.c.b16 %v449, %v448
    %466 = vmatprep.subr.bf16.mxu0 0
    %467 = vmatpush1.bf16.msra.mxu0 %v450
    %468 = vmatprep.subr.bf16.mxu0 0
    %469 = vmatpush1.bf16.msra.mxu0 %v451
    %470 = vmatprep.subr.bf16.mxu0 0
    %471 = vmatpush1.bf16.msra.mxu0 %v452
    %472 = vmatprep.subr.bf16.mxu0 0
    %473 = vmatpush1.bf16.msra.mxu0 %v453
    %474 = vmatprep.subr.bf16.mxu0 0
    %475 = vmatpush1.bf16.msra.mxu0 %v454
    %476 = vmatprep.subr.bf16.mxu0 0
    %477 = vmatpush1.bf16.msra.mxu0 %v455
    %478 = vmatprep.subr.bf16.mxu0 0
    %479 = vmatpush1.bf16.msra.mxu0 %v456
    %480 = vmatprep.subr.bf16.mxu0 0
    %481 = vmatpush1.bf16.msra.mxu0 %v457
    %482 = vmatprep.subr.bf16.mxu0 0
    %483 = vmatpush1.bf16.msra.mxu0 0
    %484 = vmatprep.subr.bf16.mxu0 0
    %485 = vmatpush1.bf16.msra.mxu0 0
    %486 = vmatprep.subr.bf16.mxu0 0
    %487 = vmatpush1.bf16.msra.mxu0 0
    %488 = vmatprep.subr.bf16.mxu0 0
    %489 = vmatpush1.bf16.msra.mxu0 0
    %490 = vmatprep.subr.bf16.mxu0 0
    %491 = vmatpush1.bf16.msra.mxu0 0
    %492 = vmatprep.subr.bf16.mxu0 0
    %493 = vmatpush1.bf16.msra.mxu0 0
    %494 = vmatprep.subr.bf16.mxu0 0
    %495 = vmatpush1.bf16.msra.mxu0 0
    %496 = vmatprep.subr.bf16.mxu0 0
    %497 = vmatpush1.bf16.msra.mxu0 0
    %498 = vmatprep.mubr.bf16.mxu0 0
    %499 = vmatmul.mubr.bf16.gmra.mrb[0].mxu0 %v392
    %v500 = vpop.f32.mrb[0].mxu0
    %v501 = vadd.f32 %v416, %v500
    %v502 = vpop.f32.mrb[0].mxu0
    %v503 = vpop.f32.mrb[0].mxu0
    %v504 = vpop.f32.mrb[0].mxu0
    %505 = vdwg.mxu0
    %v506 = vmax.f32 %v501, 0.0
    %v507 = vpack.c.bf16 %v506, %v506
    %s508 = scalar_lea.vmem [#allocation2], 256
    %v509 = vld [vmem:[%s508] sm:$0xf]
    %v510 = vld [vmem:[%s508 + $0x4] sm:$0xf]
    %v511 = vld [vmem:[%s508 + $0x8] sm:$0xf]
    %v512 = vld [vmem:[%s508 + $0xc] sm:$0xf]
    %v513 = vld [vmem:[%s508 + $0x10] sm:$0xf]
    %v514 = vld [vmem:[%s508 + $0x14] sm:$0xf]
    %v515 = vld [vmem:[%s508 + $0x18] sm:$0xf]
    %v516 = vld [vmem:[%s508 + $0x1c] sm:$0xf]
    %v517 = vld [vmem:[%s508 + $0x20] sm:$0xf]
    %v518 = vld [vmem:[%s508 + $0x24] sm:$0xf]
    %v519 = vld [vmem:[%s508 + $0x28] sm:$0xf]
    %v520 = vld [vmem:[%s508 + $0x2c] sm:$0xf]
    %v521 = vld [vmem:[%s508 + $0x30] sm:$0xf]
    %v522 = vld [vmem:[%s508 + $0x34] sm:$0xf]
    %v523 = vld [vmem:[%s508 + $0x38] sm:$0xf]
    %v524 = vld [vmem:[%s508 + $0x3c] sm:$0xf]
    %s525 = scalar_lea.vmem %s2, 4
    %v526 = vld [vmem:[%s525] sm:$0x1]
    %v528 = vlaneseq
    %v529 = vshrl.u32 %v528, 7
    %v530 = vsub.s32 0, %v529
    %v531 = vrot.slane %v526, %v530
    %v549 = vunpack.c.l.b16 %v509
    %v550 = vunpack.c.l.b16 %v510
    %v551 = vunpack.c.l.b16 %v511
    %v552 = vunpack.c.l.b16 %v512
    %v553 = vunpack.c.l.b16 %v513
    %v554 = vunpack.c.l.b16 %v514
    %v555 = vunpack.c.l.b16 %v515
    %v556 = vunpack.c.l.b16 %v516
    %v557 = vunpack.c.l.b16 %v517
    %v558 = vunpack.c.l.b16 %v518
    %v559 = vunpack.c.l.b16 %v519
    %v560 = vunpack.c.l.b16 %v520
    %v561 = vunpack.c.l.b16 %v521
    %v562 = vunpack.c.l.b16 %v522
    %v563 = vunpack.c.l.b16 %v523
    %v564 = vunpack.c.l.b16 %v524
    %v565 = vpack.c.b16 %v550, %v549
    %v566 = vpack.c.b16 %v552, %v551
    %v567 = vpack.c.b16 %v554, %v553
    %v568 = vpack.c.b16 %v556, %v555
    %v569 = vpack.c.b16 %v558, %v557
    %v570 = vpack.c.b16 %v560, %v559
    %v571 = vpack.c.b16 %v562, %v561
    %v572 = vpack.c.b16 %v564, %v563
    %581 = vmatprep.subr.bf16.mxu0 0
    %582 = vmatpush1.bf16.msra.mxu0 %v565
    %583 = vmatprep.subr.bf16.mxu0 0
    %584 = vmatpush1.bf16.msra.mxu0 %v566
    %585 = vmatprep.subr.bf16.mxu0 0
    %586 = vmatpush1.bf16.msra.mxu0 %v567
    %587 = vmatprep.subr.bf16.mxu0 0
    %588 = vmatpush1.bf16.msra.mxu0 %v568
    %589 = vmatprep.subr.bf16.mxu0 0
    %590 = vmatpush1.bf16.msra.mxu0 %v569
    %591 = vmatprep.subr.bf16.mxu0 0
    %592 = vmatpush1.bf16.msra.mxu0 %v570
    %593 = vmatprep.subr.bf16.mxu0 0
    %594 = vmatpush1.bf16.msra.mxu0 %v571
    %595 = vmatprep.subr.bf16.mxu0 0
    %596 = vmatpush1.bf16.msra.mxu0 %v572
    %597 = vmatprep.subr.bf16.mxu0 0
    %598 = vmatpush1.bf16.msra.mxu0 0
    %599 = vmatprep.subr.bf16.mxu0 0
    %600 = vmatpush1.bf16.msra.mxu0 0
    %601 = vmatprep.subr.bf16.mxu0 0
    %602 = vmatpush1.bf16.msra.mxu0 0
    %603 = vmatprep.subr.bf16.mxu0 0
    %604 = vmatpush1.bf16.msra.mxu0 0
    %605 = vmatprep.subr.bf16.mxu0 0
    %606 = vmatpush1.bf16.msra.mxu0 0
    %607 = vmatprep.subr.bf16.mxu0 0
    %608 = vmatpush1.bf16.msra.mxu0 0
    %609 = vmatprep.subr.bf16.mxu0 0
    %610 = vmatpush1.bf16.msra.mxu0 0
    %611 = vmatprep.subr.bf16.mxu0 0
    %612 = vmatpush1.bf16.msra.mxu0 0
    %613 = vmatprep.mubr.bf16.mxu0 0
    %614 = vmatmul.mubr.bf16.gmra.mrb[0].mxu0 %v507
    %v615 = vpop.f32.mrb[0].mxu0
    %v616 = vadd.f32 %v531, %v615
    %v617 = vpop.f32.mrb[0].mxu0
    %v618 = vpop.f32.mrb[0].mxu0
    %v619 = vpop.f32.mrb[0].mxu0
    %620 = vdwg.mxu0
    %v621 = vmax.f32 %v616, 0.0
    %v622 = vpack.c.bf16 %v621, %v621
    %s623 = scalar_lea.vmem [#allocation2], 320
    %v624 = vld [vmem:[%s623] sm:$0xf]
    %v625 = vld [vmem:[%s623 + $0x4] sm:$0xf]
    %v626 = vld [vmem:[%s623 + $0x8] sm:$0xf]
    %v627 = vld [vmem:[%s623 + $0xc] sm:$0xf]
    %v628 = vld [vmem:[%s623 + $0x10] sm:$0xf]
    %v629 = vld [vmem:[%s623 + $0x14] sm:$0xf]
    %v630 = vld [vmem:[%s623 + $0x18] sm:$0xf]
    %v631 = vld [vmem:[%s623 + $0x1c] sm:$0xf]
    %v632 = vld [vmem:[%s623 + $0x20] sm:$0xf]
    %v633 = vld [vmem:[%s623 + $0x24] sm:$0xf]
    %v634 = vld [vmem:[%s623 + $0x28] sm:$0xf]
    %v635 = vld [vmem:[%s623 + $0x2c] sm:$0xf]
    %v636 = vld [vmem:[%s623 + $0x30] sm:$0xf]
    %v637 = vld [vmem:[%s623 + $0x34] sm:$0xf]
    %v638 = vld [vmem:[%s623 + $0x38] sm:$0xf]
    %v639 = vld [vmem:[%s623 + $0x3c] sm:$0xf]
    %s640 = scalar_lea.vmem %s2, 5
    %v641 = vld [vmem:[%s640] sm:$0x1]
    %v643 = vlaneseq
    %v644 = vshrl.u32 %v643, 7
    %v645 = vsub.s32 0, %v644
    %v646 = vrot.slane %v641, %v645
    %v664 = vunpack.c.l.b16 %v624
    %v665 = vunpack.c.l.b16 %v625
    %v666 = vunpack.c.l.b16 %v626
    %v667 = vunpack.c.l.b16 %v627
    %v668 = vunpack.c.l.b16 %v628
    %v669 = vunpack.c.l.b16 %v629
    %v670 = vunpack.c.l.b16 %v630
    %v671 = vunpack.c.l.b16 %v631
    %v672 = vunpack.c.l.b16 %v632
    %v673 = vunpack.c.l.b16 %v633
    %v674 = vunpack.c.l.b16 %v634
    %v675 = vunpack.c.l.b16 %v635
    %v676 = vunpack.c.l.b16 %v636
    %v677 = vunpack.c.l.b16 %v637
    %v678 = vunpack.c.l.b16 %v638
    %v679 = vunpack.c.l.b16 %v639
    %v680 = vpack.c.b16 %v665, %v664
    %v681 = vpack.c.b16 %v667, %v666
    %v682 = vpack.c.b16 %v669, %v668
    %v683 = vpack.c.b16 %v671, %v670
    %v684 = vpack.c.b16 %v673, %v672
    %v685 = vpack.c.b16 %v675, %v674
    %v686 = vpack.c.b16 %v677, %v676
    %v687 = vpack.c.b16 %v679, %v678
    %696 = vmatprep.subr.bf16.mxu0 0
    %697 = vmatpush1.bf16.msra.mxu0 %v680
    %698 = vmatprep.subr.bf16.mxu0 0
    %699 = vmatpush1.bf16.msra.mxu0 %v681
    %700 = vmatprep.subr.bf16.mxu0 0
    %701 = vmatpush1.bf16.msra.mxu0 %v682
    %702 = vmatprep.subr.bf16.mxu0 0
    %703 = vmatpush1.bf16.msra.mxu0 %v683
    %704 = vmatprep.subr.bf16.mxu0 0
    %705 = vmatpush1.bf16.msra.mxu0 %v684
    %706 = vmatprep.subr.bf16.mxu0 0
    %707 = vmatpush1.bf16.msra.mxu0 %v685
    %708 = vmatprep.subr.bf16.mxu0 0
    %709 = vmatpush1.bf16.msra.mxu0 %v686
    %710 = vmatprep.subr.bf16.mxu0 0
    %711 = vmatpush1.bf16.msra.mxu0 %v687
    %712 = vmatprep.subr.bf16.mxu0 0
    %713 = vmatpush1.bf16.msra.mxu0 0
    %714 = vmatprep.subr.bf16.mxu0 0
    %715 = vmatpush1.bf16.msra.mxu0 0
    %716 = vmatprep.subr.bf16.mxu0 0
    %717 = vmatpush1.bf16.msra.mxu0 0
    %718 = vmatprep.subr.bf16.mxu0 0
    %719 = vmatpush1.bf16.msra.mxu0 0
    %720 = vmatprep.subr.bf16.mxu0 0
    %721 = vmatpush1.bf16.msra.mxu0 0
    %722 = vmatprep.subr.bf16.mxu0 0
    %723 = vmatpush1.bf16.msra.mxu0 0
    %724 = vmatprep.subr.bf16.mxu0 0
    %725 = vmatpush1.bf16.msra.mxu0 0
    %726 = vmatprep.subr.bf16.mxu0 0
    %727 = vmatpush1.bf16.msra.mxu0 0
    %728 = vmatprep.mubr.bf16.mxu0 0
    %729 = vmatmul.mubr.bf16.gmra.mrb[0].mxu0 %v622
    %v730 = vpop.f32.mrb[0].mxu0
    %v731 = vadd.f32 %v646, %v730
    %v732 = vpop.f32.mrb[0].mxu0
    %v733 = vpop.f32.mrb[0].mxu0
    %v734 = vpop.f32.mrb[0].mxu0
    %735 = vdwg.mxu0
    %v736 = vmax.f32 %v731, 0.0
    %v737 = vpack.c.bf16 %v736, %v736
    %s738 = scalar_lea.vmem [#allocation2], 384
    %v739 = vld [vmem:[%s738] sm:$0xf]
    %v740 = vld [vmem:[%s738 + $0x4] sm:$0xf]
    %v741 = vld [vmem:[%s738 + $0x8] sm:$0xf]
    %v742 = vld [vmem:[%s738 + $0xc] sm:$0xf]
    %v743 = vld [vmem:[%s738 + $0x10] sm:$0xf]
    %v744 = vld [vmem:[%s738 + $0x14] sm:$0xf]
    %v745 = vld [vmem:[%s738 + $0x18] sm:$0xf]
    %v746 = vld [vmem:[%s738 + $0x1c] sm:$0xf]
    %v747 = vld [vmem:[%s738 + $0x20] sm:$0xf]
    %v748 = vld [vmem:[%s738 + $0x24] sm:$0xf]
    %v749 = vld [vmem:[%s738 + $0x28] sm:$0xf]
    %v750 = vld [vmem:[%s738 + $0x2c] sm:$0xf]
    %v751 = vld [vmem:[%s738 + $0x30] sm:$0xf]
    %v752 = vld [vmem:[%s738 + $0x34] sm:$0xf]
    %v753 = vld [vmem:[%s738 + $0x38] sm:$0xf]
    %v754 = vld [vmem:[%s738 + $0x3c] sm:$0xf]
    %s755 = scalar_lea.vmem %s2, 6
    %v756 = vld [vmem:[%s755] sm:$0x1]
    %v758 = vlaneseq
    %v759 = vshrl.u32 %v758, 7
    %v760 = vsub.s32 0, %v759
    %v761 = vrot.slane %v756, %v760
    %v779 = vunpack.c.l.b16 %v739
    %v780 = vunpack.c.l.b16 %v740
    %v781 = vunpack.c.l.b16 %v741
    %v782 = vunpack.c.l.b16 %v742
    %v783 = vunpack.c.l.b16 %v743
    %v784 = vunpack.c.l.b16 %v744
    %v785 = vunpack.c.l.b16 %v745
    %v786 = vunpack.c.l.b16 %v746
    %v787 = vunpack.c.l.b16 %v747
    %v788 = vunpack.c.l.b16 %v748
    %v789 = vunpack.c.l.b16 %v749
    %v790 = vunpack.c.l.b16 %v750
    %v791 = vunpack.c.l.b16 %v751
    %v792 = vunpack.c.l.b16 %v752
    %v793 = vunpack.c.l.b16 %v753
    %v794 = vunpack.c.l.b16 %v754
    %v795 = vpack.c.b16 %v780, %v779
    %v796 = vpack.c.b16 %v782, %v781
    %v797 = vpack.c.b16 %v784, %v783
    %v798 = vpack.c.b16 %v786, %v785
    %v799 = vpack.c.b16 %v788, %v787
    %v800 = vpack.c.b16 %v790, %v789
    %v801 = vpack.c.b16 %v792, %v791
    %v802 = vpack.c.b16 %v794, %v793
    %811 = vmatprep.subr.bf16.mxu0 0
    %812 = vmatpush1.bf16.msra.mxu0 %v795
    %813 = vmatprep.subr.bf16.mxu0 0
    %814 = vmatpush1.bf16.msra.mxu0 %v796
    %815 = vmatprep.subr.bf16.mxu0 0
    %816 = vmatpush1.bf16.msra.mxu0 %v797
    %817 = vmatprep.subr.bf16.mxu0 0
    %818 = vmatpush1.bf16.msra.mxu0 %v798
    %819 = vmatprep.subr.bf16.mxu0 0
    %820 = vmatpush1.bf16.msra.mxu0 %v799
    %821 = vmatprep.subr.bf16.mxu0 0
    %822 = vmatpush1.bf16.msra.mxu0 %v800
    %823 = vmatprep.subr.bf16.mxu0 0
    %824 = vmatpush1.bf16.msra.mxu0 %v801
    %825 = vmatprep.subr.bf16.mxu0 0
    %826 = vmatpush1.bf16.msra.mxu0 %v802
    %827 = vmatprep.subr.bf16.mxu0 0
    %828 = vmatpush1.bf16.msra.mxu0 0
    %829 = vmatprep.subr.bf16.mxu0 0
    %830 = vmatpush1.bf16.msra.mxu0 0
    %831 = vmatprep.subr.bf16.mxu0 0
    %832 = vmatpush1.bf16.msra.mxu0 0
    %833 = vmatprep.subr.bf16.mxu0 0
    %834 = vmatpush1.bf16.msra.mxu0 0
    %835 = vmatprep.subr.bf16.mxu0 0
    %836 = vmatpush1.bf16.msra.mxu0 0
    %837 = vmatprep.subr.bf16.mxu0 0
    %838 = vmatpush1.bf16.msra.mxu0 0
    %839 = vmatprep.subr.bf16.mxu0 0
    %840 = vmatpush1.bf16.msra.mxu0 0
    %841 = vmatprep.subr.bf16.mxu0 0
    %842 = vmatpush1.bf16.msra.mxu0 0
    %843 = vmatprep.mubr.bf16.mxu0 0
    %844 = vmatmul.mubr.bf16.gmra.mrb[0].mxu0 %v737
    %v845 = vpop.f32.mrb[0].mxu0
    %v846 = vadd.f32 %v761, %v845
    %v847 = vpop.f32.mrb[0].mxu0
    %v848 = vpop.f32.mrb[0].mxu0
    %v849 = vpop.f32.mrb[0].mxu0
    %850 = vdwg.mxu0
    %v851 = vmax.f32 %v846, 0.0
    %v852 = vpack.c.bf16 %v851, %v851
    %s853 = scalar_lea.vmem [#allocation2], 448
    %v854 = vld [vmem:[%s853] sm:$0xf]
    %v855 = vld [vmem:[%s853 + $0x4] sm:$0xf]
    %v856 = vld [vmem:[%s853 + $0x8] sm:$0xf]
    %v857 = vld [vmem:[%s853 + $0xc] sm:$0xf]
    %v858 = vld [vmem:[%s853 + $0x10] sm:$0xf]
    %v859 = vld [vmem:[%s853 + $0x14] sm:$0xf]
    %v860 = vld [vmem:[%s853 + $0x18] sm:$0xf]
    %v861 = vld [vmem:[%s853 + $0x1c] sm:$0xf]
    %v862 = vld [vmem:[%s853 + $0x20] sm:$0xf]
    %v863 = vld [vmem:[%s853 + $0x24] sm:$0xf]
    %v864 = vld [vmem:[%s853 + $0x28] sm:$0xf]
    %v865 = vld [vmem:[%s853 + $0x2c] sm:$0xf]
    %v866 = vld [vmem:[%s853 + $0x30] sm:$0xf]
    %v867 = vld [vmem:[%s853 + $0x34] sm:$0xf]
    %v868 = vld [vmem:[%s853 + $0x38] sm:$0xf]
    %v869 = vld [vmem:[%s853 + $0x3c] sm:$0xf]
    %s870 = scalar_lea.vmem %s2, 7
    %v871 = vld [vmem:[%s870] sm:$0x1]
    %v873 = vlaneseq
    %v874 = vshrl.u32 %v873, 7
    %v875 = vsub.s32 0, %v874
    %v876 = vrot.slane %v871, %v875
    %v894 = vunpack.c.l.b16 %v854
    %v895 = vunpack.c.l.b16 %v855
    %v896 = vunpack.c.l.b16 %v856
    %v897 = vunpack.c.l.b16 %v857
    %v898 = vunpack.c.l.b16 %v858
    %v899 = vunpack.c.l.b16 %v859
    %v900 = vunpack.c.l.b16 %v860
    %v901 = vunpack.c.l.b16 %v861
    %v902 = vunpack.c.l.b16 %v862
    %v903 = vunpack.c.l.b16 %v863
    %v904 = vunpack.c.l.b16 %v864
    %v905 = vunpack.c.l.b16 %v865
    %v906 = vunpack.c.l.b16 %v866
    %v907 = vunpack.c.l.b16 %v867
    %v908 = vunpack.c.l.b16 %v868
    %v909 = vunpack.c.l.b16 %v869
    %v910 = vpack.c.b16 %v895, %v894
    %v911 = vpack.c.b16 %v897, %v896
    %v912 = vpack.c.b16 %v899, %v898
    %v913 = vpack.c.b16 %v901, %v900
    %v914 = vpack.c.b16 %v903, %v902
    %v915 = vpack.c.b16 %v905, %v904
    %v916 = vpack.c.b16 %v907, %v906
    %v917 = vpack.c.b16 %v909, %v908
    %926 = vmatprep.subr.bf16.mxu0 0
    %927 = vmatpush1.bf16.msra.mxu0 %v910
    %928 = vmatprep.subr.bf16.mxu0 0
    %929 = vmatpush1.bf16.msra.mxu0 %v911
    %930 = vmatprep.subr.bf16.mxu0 0
    %931 = vmatpush1.bf16.msra.mxu0 %v912
    %932 = vmatprep.subr.bf16.mxu0 0
    %933 = vmatpush1.bf16.msra.mxu0 %v913
    %934 = vmatprep.subr.bf16.mxu0 0
    %935 = vmatpush1.bf16.msra.mxu0 %v914
    %936 = vmatprep.subr.bf16.mxu0 0
    %937 = vmatpush1.bf16.msra.mxu0 %v915
    %938 = vmatprep.subr.bf16.mxu0 0
    %939 = vmatpush1.bf16.msra.mxu0 %v916
    %940 = vmatprep.subr.bf16.mxu0 0
    %941 = vmatpush1.bf16.msra.mxu0 %v917
    %942 = vmatprep.subr.bf16.mxu0 0
    %943 = vmatpush1.bf16.msra.mxu0 0
    %944 = vmatprep.subr.bf16.mxu0 0
    %945 = vmatpush1.bf16.msra.mxu0 0
    %946 = vmatprep.subr.bf16.mxu0 0
    %947 = vmatpush1.bf16.msra.mxu0 0
    %948 = vmatprep.subr.bf16.mxu0 0
    %949 = vmatpush1.bf16.msra.mxu0 0
    %950 = vmatprep.subr.bf16.mxu0 0
    %951 = vmatpush1.bf16.msra.mxu0 0
    %952 = vmatprep.subr.bf16.mxu0 0
    %953 = vmatpush1.bf16.msra.mxu0 0
    %954 = vmatprep.subr.bf16.mxu0 0
    %955 = vmatpush1.bf16.msra.mxu0 0
    %956 = vmatprep.subr.bf16.mxu0 0
    %957 = vmatpush1.bf16.msra.mxu0 0
    %958 = vmatprep.mubr.bf16.mxu0 0
    %959 = vmatmul.mubr.bf16.gmra.mrb[0].mxu0 %v852
    %v960 = vpop.f32.mrb[0].mxu0
    %v961 = vadd.f32 %v876, %v960
    %v962 = vpop.f32.mrb[0].mxu0
    %v963 = vpop.f32.mrb[0].mxu0
    %v964 = vpop.f32.mrb[0].mxu0
    %965 = vdwg.mxu0
    %v966 = vmax.f32 %v961, 0.0
    %v967 = vpack.c.bf16 %v966, %v966
    %v968 = vld [vmem:[#allocation4] sm:$0xf]
    %v969 = vld [vmem:[#allocation4 + $0x4] sm:$0xf]
    %v970 = vld [vmem:[#allocation4 + $0x8] sm:$0xf]
    %v971 = vld [vmem:[#allocation4 + $0xc] sm:$0xf]
    %v972 = vld [vmem:[#allocation4 + $0x10] sm:$0xf]
    %v973 = vld [vmem:[#allocation4 + $0x14] sm:$0xf]
    %v974 = vld [vmem:[#allocation4 + $0x18] sm:$0xf]
    %v975 = vld [vmem:[#allocation4 + $0x1c] sm:$0xf]
    %v976 = vld [vmem:[#allocation4 + $0x20] sm:$0xf]
    %v977 = vld [vmem:[#allocation4 + $0x24] sm:$0xf]
    %v978 = vld [vmem:[#allocation4 + $0x28] sm:$0xf]
    %v979 = vld [vmem:[#allocation4 + $0x2c] sm:$0xf]
    %v980 = vld [vmem:[#allocation4 + $0x30] sm:$0xf]
    %v981 = vld [vmem:[#allocation4 + $0x34] sm:$0xf]
    %v982 = vld [vmem:[#allocation4 + $0x38] sm:$0xf]
    %v983 = vld [vmem:[#allocation4 + $0x3c] sm:$0xf]
    %v984 = vld [vmem:[%s4] sm:$0x1]
    %v986 = vlaneseq
    %v987 = vshrl.u32 %v986, 7
    %v988 = vsub.s32 0, %v987
    %v989 = vrot.slane %v984, %v988
    %v1007 = vunpack.c.l.b16 %v968
    %v1008 = vunpack.c.l.b16 %v969
    %v1009 = vunpack.c.l.b16 %v970
    %v1010 = vunpack.c.l.b16 %v971
    %v1011 = vunpack.c.l.b16 %v972
    %v1012 = vunpack.c.l.b16 %v973
    %v1013 = vunpack.c.l.b16 %v974
    %v1014 = vunpack.c.l.b16 %v975
    %v1015 = vunpack.c.l.b16 %v976
    %v1016 = vunpack.c.l.b16 %v977
    %v1017 = vunpack.c.l.b16 %v978
    %v1018 = vunpack.c.l.b16 %v979
    %v1019 = vunpack.c.l.b16 %v980
    %v1020 = vunpack.c.l.b16 %v981
    %v1021 = vunpack.c.l.b16 %v982
    %v1022 = vunpack.c.l.b16 %v983
    %v1023 = vpack.c.b16 %v1008, %v1007
    %v1024 = vpack.c.b16 %v1010, %v1009
    %v1025 = vpack.c.b16 %v1012, %v1011
    %v1026 = vpack.c.b16 %v1014, %v1013
    %v1027 = vpack.c.b16 %v1016, %v1015
    %v1028 = vpack.c.b16 %v1018, %v1017
    %v1029 = vpack.c.b16 %v1020, %v1019
    %v1030 = vpack.c.b16 %v1022, %v1021
    %1039 = vmatprep.subr.bf16.mxu0 0
    %1040 = vmatpush1.bf16.msra.mxu0 %v1023
    %1041 = vmatprep.subr.bf16.mxu0 0
    %1042 = vmatpush1.bf16.msra.mxu0 %v1024
    %1043 = vmatprep.subr.bf16.mxu0 0
    %1044 = vmatpush1.bf16.msra.mxu0 %v1025
    %1045 = vmatprep.subr.bf16.mxu0 0
    %1046 = vmatpush1.bf16.msra.mxu0 %v1026
    %1047 = vmatprep.subr.bf16.mxu0 0
    %1048 = vmatpush1.bf16.msra.mxu0 %v1027
    %1049 = vmatprep.subr.bf16.mxu0 0
    %1050 = vmatpush1.bf16.msra.mxu0 %v1028
    %1051 = vmatprep.subr.bf16.mxu0 0
    %1052 = vmatpush1.bf16.msra.mxu0 %v1029
    %1053 = vmatprep.subr.bf16.mxu0 0
    %1054 = vmatpush1.bf16.msra.mxu0 %v1030
    %1055 = vmatprep.subr.bf16.mxu0 0
    %1056 = vmatpush1.bf16.msra.mxu0 0
    %1057 = vmatprep.subr.bf16.mxu0 0
    %1058 = vmatpush1.bf16.msra.mxu0 0
    %1059 = vmatprep.subr.bf16.mxu0 0
    %1060 = vmatpush1.bf16.msra.mxu0 0
    %1061 = vmatprep.subr.bf16.mxu0 0
    %1062 = vmatpush1.bf16.msra.mxu0 0
    %1063 = vmatprep.subr.bf16.mxu0 0
    %1064 = vmatpush1.bf16.msra.mxu0 0
    %1065 = vmatprep.subr.bf16.mxu0 0
    %1066 = vmatpush1.bf16.msra.mxu0 0
    %1067 = vmatprep.subr.bf16.mxu0 0
    %1068 = vmatpush1.bf16.msra.mxu0 0
    %1069 = vmatprep.subr.bf16.mxu0 0
    %1070 = vmatpush1.bf16.msra.mxu0 0
    %1071 = vmatprep.mubr.bf16.mxu0 0
    %1072 = vmatmul.mubr.bf16.gmra.mrb[0].mxu0 %v967
    %v1073 = vpop.f32.mrb[0].mxu0
    %v1074 = vadd.f32 %v989, %v1073
    %v1075 = vpop.f32.mrb[0].mxu0
    %v1076 = vpop.f32.mrb[0].mxu0
    %v1077 = vpop.f32.mrb[0].mxu0
    %1078 = vdwg.mxu0
    %1079 = vst [vmem:[%s5] sm:$0xff] %v1074
    // Predicated region
    $region30: #{mlp_large_forward.1} parent=1 // pred_check
      _
    $region31: #{mlp_large_forward.1} parent=1 // pred_check_branch
      %1081 = sbr.rel (0) target = $region33
    $region32: #{mlp_large_forward.1} parent=1 // pred_region
      _
    $region33: #{mlp_large_forward.1} parent=1 // pred_fallthru
      _
    // Predicated region
    $region34: #{mlp_large_forward.1} parent=1 // pred_check
      _
    $region35: #{mlp_large_forward.1} parent=1 // pred_check_branch
      %1083 = sbr.rel (0) target = $region37
    $region36: #{mlp_large_forward.1} parent=1 // pred_region
      _
    $region37: #{mlp_large_forward.1} parent=1 // pred_fallthru
      _
    %1084 = vsyncpa [#allocation3], 1
    %1085 = vsyncpa [#allocation5], 1

</llo_original>
